<compile_context>
chip_gen: v6e
topology: v6e:2x2x1
jax: 0.10.0
libtpu: 0.0.40
codegen_flags: <defaults>
</compile_context>

<pallas_src>
import jax
import jax.numpy as jnp
from jax.experimental import pallas as pl
from jax.experimental.pallas import tpu as pltpu

EPS = 1e-15


def _diffpool_kernel(x_ref, adj_ref, w_ref, slab_ref, loss_ref):
    x_aug = x_ref[...]      # (B, N, C+1) f32, last column is all-ones
    adj = adj_ref[...]      # (B, N, N)   f32
    w = w_ref[...]          # (C+1, 2K+1) f32 augmented fused weight

    B, N, C1 = x_aug.shape
    C = C1 - 1
    K = (w.shape[-1] - 1) // 2

    # ---- fused projection: one 2-D MXU matmul over M = B*N rows ----
    #   cols [0:K)   -> x @ W_rel
    #   col   K      -> 1   (carried ones column, used for degree via MXU)
    #   cols [K+1:)  -> x @ W_root + b_rel   (bias folded into the weight)
    xw = jnp.dot(x_aug.reshape(B * N, C1), w,
                 preferred_element_type=jnp.float32).reshape(B, N, 2 * K + 1)

    # ---- adj @ [x W_rel | 1] -> [agg | deg] in a single contraction ----
    # (D^-1 adj x) W_rel == D^-1 (adj (x W_rel)): row scaling commutes past the
    # projection, so the adjacency matmul contracts into K+1 columns, not C.
    agg_deg = jnp.einsum('bnm,bmk->bnk', adj, xw[..., :K + 1],
                         preferred_element_type=jnp.float32)        # (B, N, K+1)
    deg = jnp.maximum(agg_deg[..., K:K + 1], 1.0)                   # (B, N, 1)
    s = agg_deg[..., :K] / deg + xw[..., K + 1:]                    # (B, N, K)

    # ---- softmax over clusters (last dim), f32 ----
    s = s - jnp.max(s, axis=-1, keepdims=True)
    s = jnp.exp(s)
    s = s / jnp.sum(s, axis=-1, keepdims=True)

    # ---- entropy loss ----
    ent_sum = jnp.sum(-s * jnp.log(s + EPS))

    # ---- fused s^T @ [x | s] -> [out | g] (one padded MXU call, lane-denser) ----
    x = x_aug[..., :C]
    outg = jnp.einsum('bnk,bnd->bkd', s, jnp.concatenate([x, s], axis=-1),
                      preferred_element_type=jnp.float32)           # (B, K, C+K)
    out = outg[..., :C]                                             # s^T x
    g = outg[..., C:]                                               # s^T s

    sta = jnp.einsum('bnk,bnm->bkm', s, adj,
                     preferred_element_type=jnp.float32)            # (B, K, N)
    out_adj = jnp.einsum('bkm,bml->bkl', sta, s,
                         preferred_element_type=jnp.float32)        # (B, K, K)

    # ---- single lane-denser output slab: [out | out_adj], one store ----
    slab_ref[...] = jnp.concatenate([out, out_adj], axis=-1)        # (B, K, C+K)

    # ---- link loss via trace identity (never materialise s s^T) ----
    # ||adj - s s^T||_F^2 = sum(adj^2) - 2 tr(s^T adj s) + ||s^T s||_F^2
    row = jax.lax.broadcasted_iota(jnp.int32, (K, K), 0)
    col = jax.lax.broadcasted_iota(jnp.int32, (K, K), 1)
    eye = (row == col).astype(jnp.float32)
    tr = jnp.sum(out_adj * eye[None, :, :])
    link_sq = jnp.sum(adj * adj) - 2.0 * tr + jnp.sum(g * g)
    link = jnp.sqrt(jnp.maximum(link_sq, 0.0)) / float(B * N * N)   # norm / numel
    ent = ent_sum / float(B * N)                                    # .sum(-1).mean()

    # both scalar losses packed into one (1, 2) store
    lane = jax.lax.broadcasted_iota(jnp.int32, (1, 2), 1)
    loss_ref[...] = jnp.where(lane == 0, link, ent)


def _padded_f32_bytes(shape):
    # (8, 128) tile padding on the trailing two dims.
    *lead, r, c = shape
    r = -(-r // 8) * 8
    c = -(-c // 128) * 128
    n = r * c
    for d in lead:
        n *= d
    return 4 * n


def diff_pool(x, adj, w_rel, b_rel, w_root):
    B, N, C = x.shape
    K = w_rel.shape[1]

    x = x.astype(jnp.float32)
    adj = adj.astype(jnp.float32)
    w_rel = w_rel.astype(jnp.float32)
    w_root = w_root.astype(jnp.float32)
    b_rel = b_rel.astype(jnp.float32)

    # Affine augmentation: x_aug = [x | 1]  (lets the kernel fold the bias and
    # compute the degree on the MXU).
    x_aug = jnp.concatenate([x, jnp.ones((B, N, 1), jnp.float32)], axis=-1)

    # Augmented fused weight (C+1, 2K+1):
    #   cols [0:K)   rows 0..C-1 = W_rel, row C = 0
    #   col   K      rows 0..C-1 = 0,     row C = 1   (ones passthrough)
    #   cols [K+1:)  rows 0..C-1 = W_root, row C = b_rel
    w_rel_aug = jnp.concatenate([w_rel, jnp.zeros((1, K), jnp.float32)], axis=0)
    ones_col = jnp.concatenate([jnp.zeros((C, 1), jnp.float32),
                                jnp.ones((1, 1), jnp.float32)], axis=0)
    w_root_aug = jnp.concatenate([w_root, b_rel.reshape(1, K)], axis=0)
    w_aug = jnp.concatenate([w_rel_aug, ones_col, w_root_aug], axis=1)   # (C+1, 2K+1)

    # Scoped-VMEM limit sized from the real padded footprint (never below the
    # per-generation defaults; capped under v7x's 64 MiB physical VMEM).
    vmem_est = sum(_padded_f32_bytes(s) for s in [
        (B, N, N), (B, N, C + 1), (C + 1, 2 * K + 1),     # inputs
        (B, N, 2 * K + 1), (B, N, K + 1), (B, N, K),      # xw, [agg|deg], s
        (B, N, C + K),                                    # [x | s]
        (B, K, C + K), (B, K, N), (B, K, K),              # outg, sta, out_adj
        (B, K, C + K), (1, 2),                            # outputs
    ])
    vmem_limit = min(max(4 * vmem_est, 16 << 20), 48 << 20)

    out_shapes = (
        jax.ShapeDtypeStruct((B, K, C + K), jnp.float32),   # [out | out_adj] slab
        jax.ShapeDtypeStruct((1, 2), jnp.float32),          # [link, ent]
    )
    vmem = pl.BlockSpec(memory_space=pltpu.MemorySpace.VMEM)

    # Single invocation (grid=()): whole arrays live in VMEM, losses computed
    # directly, outputs written as one slab + one packed scalar pair.
    slab, losses = pl.pallas_call(
        _diffpool_kernel,
        out_shape=out_shapes,
        in_specs=[vmem, vmem, vmem],
        out_specs=(vmem, vmem),
        compiler_params=pltpu.CompilerParams(vmem_limit_bytes=vmem_limit),
    )(x_aug, adj, w_aug)

    out = slab[..., :C]
    out_adj = slab[..., C:]
    return out, out_adj, losses[0, 0], losses[0, 1]


def _reference(x, adj, w_rel, b_rel, w_root):
    agg = jnp.einsum('bnm,bmc->bnc', adj, x)
    deg = jnp.maximum(adj.sum(-1, keepdims=True), 1.0)
    agg = agg / deg
    s = agg @ w_rel + b_rel + x @ w_root
    s = jax.nn.softmax(s, axis=-1)
    out = jnp.einsum('bnk,bnc->bkc', s, x)
    out_adj = jnp.einsum('bnk,bnm,bml->bkl', s, adj, s)
    link = jnp.sqrt(jnp.sum((adj - jnp.einsum('bnk,bmk->bnm', s, s)) ** 2)) / adj.size
    ent = jnp.mean(jnp.sum(-s * jnp.log(s + EPS), axis=-1))
    return out, out_adj, link, ent


if __name__ == "__main__":
    B, N, C, K = 2, 16, 8, 4   # batch, nodes, in_channel, hidden_size (= clusters)

    key = jax.random.PRNGKey(0)
    kx, ka, k1, k2, k3 = jax.random.split(key, 5)

    x = jax.random.normal(kx, (B, N, C), dtype=jnp.float32)
    adj = (jax.random.uniform(ka, (B, N, N)) < 0.3).astype(jnp.float32)
    adj = jnp.maximum(adj, jnp.swapaxes(adj, 1, 2))  # symmetric 0/1 adjacency

    # Deterministic parameter init (shapes from DenseSAGEConv(in_channel, hidden_size)).
    # Stored as (in, out) so the kernel does x @ W (torch Linear applies x @ W^T).
    bound = 1.0 / (C ** 0.5)
    w_rel = jax.random.uniform(k1, (C, K), minval=-bound, maxval=bound, dtype=jnp.float32)
    b_rel = jax.random.uniform(k2, (K,), minval=-bound, maxval=bound, dtype=jnp.float32)
    w_root = jax.random.uniform(k3, (C, K), minval=-bound, maxval=bound, dtype=jnp.float32)

    out, out_adj, link, ent = diff_pool(x, adj, w_rel, b_rel, w_root)
    jax.block_until_ready((out, out_adj, link, ent))

    r_out, r_adj, r_link, r_ent = _reference(x, adj, w_rel, b_rel, w_root)
    assert jnp.allclose(out, r_out, atol=1e-4, rtol=1e-4)
    assert jnp.allclose(out_adj, r_adj, atol=1e-4, rtol=1e-4)
    assert jnp.allclose(link, r_link, atol=1e-5, rtol=1e-4)
    assert jnp.allclose(ent, r_ent, atol=1e-5, rtol=1e-4)

    print("KERNEL_OK")
</pallas_src>

<mosaic_0001>
module attributes {stable_mosaic.version = 11 : i64} {
  func.func @_diffpool_kernel(%arg0: memref<2x16x9xf32, #tpu.memory_space<vmem>>, %arg1: memref<2x16x16xf32, #tpu.memory_space<vmem>>, %arg2: memref<9x9xf32, #tpu.memory_space<vmem>>, %arg3: memref<2x4x12xf32, #tpu.memory_space<vmem>>, %arg4: memref<1x2xf32, #tpu.memory_space<vmem>>) attributes {dimension_semantics = [], scalar_prefetch = 0 : i64, scratch_operands = 0 : i64, tpu.core_type = #tpu.core_type<tc>} {
    %c0 = arith.constant 0 : index
    %c0_0 = arith.constant 0 : index
    %c0_1 = arith.constant 0 : index
    %0 = vector.load %arg0[%c0, %c0_0, %c0_1] : memref<2x16x9xf32, #tpu.memory_space<vmem>>, vector<2x16x9xf32>
    %c0_2 = arith.constant 0 : index
    %c0_3 = arith.constant 0 : index
    %c0_4 = arith.constant 0 : index
    %1 = vector.load %arg1[%c0_2, %c0_3, %c0_4] : memref<2x16x16xf32, #tpu.memory_space<vmem>>, vector<2x16x16xf32>
    %c0_5 = arith.constant 0 : index
    %c0_6 = arith.constant 0 : index
    %2 = vector.load %arg2[%c0_5, %c0_6] : memref<9x9xf32, #tpu.memory_space<vmem>>, vector<9x9xf32>
    %3 = vector.shape_cast %0 : vector<2x16x9xf32> to vector<32x9xf32>
    %cst = arith.constant dense<0.000000e+00> : vector<32x9xf32>
    %4 = tpu.matmul %3, %2, %cst {dimension_numbers = #tpu.dot_dimension_numbers<[1], [0], [0], [1], [0, 0, 1, 1], [], []>} : vector<32x9xf32>, vector<9x9xf32>, vector<32x9xf32> -> vector<32x9xf32>
    %5 = vector.shape_cast %4 : vector<32x9xf32> to vector<2x16x9xf32>
    %6 = vector.extract_strided_slice %5 {offsets = [0, 0, 0], sizes = [2, 16, 5], strides = [1, 1, 1]} : vector<2x16x9xf32> to vector<2x16x5xf32>
    "tpu.trace_start"() <{level = 10 : i32, message = "bnm,bmk->bnk"}> : () -> ()
    %cst_7 = arith.constant dense<0.000000e+00> : vector<2x16x5xf32>
    %7 = tpu.matmul %1, %6, %cst_7 {dimension_numbers = #tpu.dot_dimension_numbers<[2], [1], [1], [2], [0, 0, 0, 1, 1, 2], [0], [0]>} : vector<2x16x16xf32>, vector<2x16x5xf32>, vector<2x16x5xf32> -> vector<2x16x5xf32>
    "tpu.trace_stop"() : () -> ()
    %8 = vector.extract_strided_slice %7 {offsets = [0, 0, 4], sizes = [2, 16, 1], strides = [1, 1, 1]} : vector<2x16x5xf32> to vector<2x16x1xf32>
    %cst_8 = arith.constant 1.000000e+00 : f32
    %9 = vector.broadcast %cst_8 : f32 to vector<2x16x1xf32>
    %10 = arith.maximumf %8, %9 : vector<2x16x1xf32>
    %11 = vector.extract_strided_slice %7 {offsets = [0, 0, 0], sizes = [2, 16, 4], strides = [1, 1, 1]} : vector<2x16x5xf32> to vector<2x16x4xf32>
    %12 = vector.broadcast %10 : vector<2x16x1xf32> to vector<2x16x4xf32>
    %13 = arith.divf %11, %12 : vector<2x16x4xf32>
    %14 = vector.extract_strided_slice %5 {offsets = [0, 0, 5], sizes = [2, 16, 4], strides = [1, 1, 1]} : vector<2x16x9xf32> to vector<2x16x4xf32>
    %15 = arith.addf %13, %14 : vector<2x16x4xf32>
    %cst_9 = arith.constant dense<0xFF800000> : vector<2x16xf32>
    %16 = vector.multi_reduction <maximumf>, %15, %cst_9 [2] : vector<2x16x4xf32> to vector<2x16xf32>
    %17 = vector.shape_cast %16 : vector<2x16xf32> to vector<2x16x1xf32>
    %18 = vector.broadcast %17 : vector<2x16x1xf32> to vector<2x16x4xf32>
    %19 = arith.subf %15, %18 : vector<2x16x4xf32>
    %20 = math.exp %19 : vector<2x16x4xf32>
    %cst_10 = arith.constant dense<0.000000e+00> : vector<2x16xf32>
    %21 = vector.multi_reduction <add>, %20, %cst_10 [2] : vector<2x16x4xf32> to vector<2x16xf32>
    %22 = vector.shape_cast %21 : vector<2x16xf32> to vector<2x16x1xf32>
    %23 = vector.broadcast %22 : vector<2x16x1xf32> to vector<2x16x4xf32>
    %24 = arith.divf %20, %23 : vector<2x16x4xf32>
    %cst_11 = arith.constant 0.000000e+00 : f32
    %25 = vector.broadcast %cst_11 : f32 to vector<2x16x4xf32>
    %26 = arith.subf %25, %24 : vector<2x16x4xf32>
    %cst_12 = arith.constant 1.000000e-15 : f32
    %27 = vector.broadcast %cst_12 : f32 to vector<2x16x4xf32>
    %28 = arith.addf %24, %27 : vector<2x16x4xf32>
    %29 = math.log %28 : vector<2x16x4xf32>
    %30 = arith.mulf %26, %29 : vector<2x16x4xf32>
    %31 = vector.shape_cast %30 : vector<2x16x4xf32> to vector<1x2x16x4xf32>
    %cst_13 = arith.constant dense<0.000000e+00> : vector<1xf32>
    %32 = vector.multi_reduction <add>, %31, %cst_13 [1, 2, 3] : vector<1x2x16x4xf32> to vector<1xf32>
    %33 = vector.shape_cast %32 : vector<1xf32> to vector<1x1x1x1xf32>
    %34 = vector.extract %33[0, 0, 0, 0] : f32 from vector<1x1x1x1xf32>
    %35 = vector.extract_strided_slice %0 {offsets = [0, 0, 0], sizes = [2, 16, 8], strides = [1, 1, 1]} : vector<2x16x9xf32> to vector<2x16x8xf32>
    %36 = tpu.concatenate %35, %24 in 2 : vector<2x16x8xf32>, vector<2x16x4xf32> -> vector<2x16x12xf32>
    "tpu.trace_start"() <{level = 10 : i32, message = "bnk,bnd->bkd"}> : () -> ()
    %cst_14 = arith.constant dense<0.000000e+00> : vector<2x4x12xf32>
    %37 = tpu.matmul %24, %36, %cst_14 {dimension_numbers = #tpu.dot_dimension_numbers<[1], [1], [2], [2], [0, 0, 0, 2, 1, 2], [0], [0]>} : vector<2x16x4xf32>, vector<2x16x12xf32>, vector<2x4x12xf32> -> vector<2x4x12xf32>
    "tpu.trace_stop"() : () -> ()
    %38 = vector.extract_strided_slice %37 {offsets = [0, 0, 0], sizes = [2, 4, 8], strides = [1, 1, 1]} : vector<2x4x12xf32> to vector<2x4x8xf32>
    %39 = vector.extract_strided_slice %37 {offsets = [0, 0, 8], sizes = [2, 4, 4], strides = [1, 1, 1]} : vector<2x4x12xf32> to vector<2x4x4xf32>
    "tpu.trace_start"() <{level = 10 : i32, message = "bnk,bnm->bkm"}> : () -> ()
    %cst_15 = arith.constant dense<0.000000e+00> : vector<2x4x16xf32>
    %40 = tpu.matmul %24, %1, %cst_15 {dimension_numbers = #tpu.dot_dimension_numbers<[1], [1], [2], [2], [0, 0, 0, 2, 1, 2], [0], [0]>} : vector<2x16x4xf32>, vector<2x16x16xf32>, vector<2x4x16xf32> -> vector<2x4x16xf32>
    "tpu.trace_stop"() : () -> ()
    "tpu.trace_start"() <{level = 10 : i32, message = "bkm,bml->bkl"}> : () -> ()
    %cst_16 = arith.constant dense<0.000000e+00> : vector<2x4x4xf32>
    %41 = tpu.matmul %40, %24, %cst_16 {dimension_numbers = #tpu.dot_dimension_numbers<[2], [1], [1], [2], [0, 0, 0, 1, 1, 2], [0], [0]>} : vector<2x4x16xf32>, vector<2x16x4xf32>, vector<2x4x4xf32> -> vector<2x4x4xf32>
    "tpu.trace_stop"() : () -> ()
    %42 = tpu.concatenate %38, %41 in 2 : vector<2x4x8xf32>, vector<2x4x4xf32> -> vector<2x4x12xf32>
    %c0_17 = arith.constant 0 : index
    %c0_18 = arith.constant 0 : index
    %c0_19 = arith.constant 0 : index
    %43 = vector.load %arg3[%c0_17, %c0_18, %c0_19] : memref<2x4x12xf32, #tpu.memory_space<vmem>>, vector<2x4x12xf32>
    tpu.vector_store %arg3[%c0_17, %c0_18, %c0_19], %42 {strides = array<i32>} : memref<2x4x12xf32, #tpu.memory_space<vmem>>, vector<2x4x12xf32>,
    %44 = tpu.iota {dimensions = array<i32: 0>} : vector<4x4xi32>
    %45 = tpu.iota {dimensions = array<i32: 1>} : vector<4x4xi32>
    %46 = arith.cmpi eq, %44, %45 : vector<4x4xi32>
    %47 = arith.extui %46 : vector<4x4xi1> to vector<4x4xi32>
    %48 = arith.sitofp %47 : vector<4x4xi32> to vector<4x4xf32>
    %49 = vector.shape_cast %48 : vector<4x4xf32> to vector<1x4x4xf32>
    %50 = vector.broadcast %49 : vector<1x4x4xf32> to vector<2x4x4xf32>
    %51 = arith.mulf %41, %50 : vector<2x4x4xf32>
    %52 = vector.shape_cast %51 : vector<2x4x4xf32> to vector<1x2x4x4xf32>
    %cst_20 = arith.constant dense<0.000000e+00> : vector<1xf32>
    %53 = vector.multi_reduction <add>, %52, %cst_20 [1, 2, 3] : vector<1x2x4x4xf32> to vector<1xf32>
    %54 = vector.shape_cast %53 : vector<1xf32> to vector<1x1x1x1xf32>
    %55 = vector.extract %54[0, 0, 0, 0] : f32 from vector<1x1x1x1xf32>
    %56 = arith.mulf %1, %1 : vector<2x16x16xf32>
    %57 = vector.shape_cast %56 : vector<2x16x16xf32> to vector<1x2x16x16xf32>
    %cst_21 = arith.constant dense<0.000000e+00> : vector<1xf32>
    %58 = vector.multi_reduction <add>, %57, %cst_21 [1, 2, 3] : vector<1x2x16x16xf32> to vector<1xf32>
    %59 = vector.shape_cast %58 : vector<1xf32> to vector<1x1x1x1xf32>
    %60 = vector.extract %59[0, 0, 0, 0] : f32 from vector<1x1x1x1xf32>
    %cst_22 = arith.constant 2.000000e+00 : f32
    %61 = arith.mulf %cst_22, %55 : f32
    %62 = arith.subf %60, %61 : f32
    %63 = arith.mulf %39, %39 : vector<2x4x4xf32>
    %64 = vector.shape_cast %63 : vector<2x4x4xf32> to vector<1x2x4x4xf32>
    %cst_23 = arith.constant dense<0.000000e+00> : vector<1xf32>
    %65 = vector.multi_reduction <add>, %64, %cst_23 [1, 2, 3] : vector<1x2x4x4xf32> to vector<1xf32>
    %66 = vector.shape_cast %65 : vector<1xf32> to vector<1x1x1x1xf32>
    %67 = vector.extract %66[0, 0, 0, 0] : f32 from vector<1x1x1x1xf32>
    %68 = arith.addf %62, %67 : f32
    %cst_24 = arith.constant 0.000000e+00 : f32
    %69 = arith.maximumf %68, %cst_24 : f32
    %70 = math.sqrt %69 : f32
    %cst_25 = arith.constant 5.120000e+02 : f32
    %71 = arith.divf %70, %cst_25 : f32
    %cst_26 = arith.constant 3.200000e+01 : f32
    %72 = arith.divf %34, %cst_26 : f32
    %73 = tpu.iota {dimensions = array<i32: 1>} : vector<1x2xi32>
    %c0_i32 = arith.constant 0 : i32
    %74 = vector.broadcast %c0_i32 : i32 to vector<1x2xi32>
    %75 = arith.cmpi eq, %73, %74 : vector<1x2xi32>
    %76 = vector.broadcast %71 : f32 to vector<1x2xf32>
    %77 = vector.broadcast %72 : f32 to vector<1x2xf32>
    %78 = arith.select %75, %76, %77 : vector<1x2xi1>, vector<1x2xf32>
    %c0_27 = arith.constant 0 : index
    %c0_28 = arith.constant 0 : index
    %79 = vector.load %arg4[%c0_27, %c0_28] : memref<1x2xf32, #tpu.memory_space<vmem>>, vector<1x2xf32>
    tpu.vector_store %arg4[%c0_27, %c0_28], %78 {strides = array<i32>} : memref<1x2xf32, #tpu.memory_space<vmem>>, vector<1x2xf32>,
    return
  }
}

</mosaic_0001>

<llo_original>
// kernel: tpu_custom_call.1
$region0: #{tpu_custom_call.1}
  #allocation0 [shape = 'u32[]', space=smem, size = 0x4, offset = 0x4, fixed_abs, tag = 'smem constant byte address 0x4 - core index']
  #allocation1 [shape = 'u32[144,128]{1,0:T(1,128)}', space=vmem, size = 0x12000, scoped, tag = 'internal scratch']
  %s0 = inlined_call_operand.vmem [shape: f32[2,16,9], index: 0, kind: input, shape index: {}]
  %s1 = inlined_call_operand.vmem [shape: f32[2,16,16], index: 1, kind: input, shape index: {}]
  %s2 = inlined_call_operand.vmem [shape: f32[9,9], index: 2, kind: input, shape index: {}]
  %s3 = inlined_call_operand.hbm [shape: f32[2,4,12], index: 3, kind: output, shape index: {0}]
  %s4 = inlined_call_operand.hbm [shape: f32[1,2], index: 4, kind: output, shape index: {1}]
  %5 = xla_tuple %s3, %s4
  %s6 = sld [smem:[#allocation0]]
  $region30: #{tpu_custom_call.1} parent=0
    _
  %s8 = ssub.s32 1, %s6
  %s9 = scalar_select 0, %s8, %s6
  $region1: #{tpu_custom_call.1} parent=0
    #allocation2 [shape = 'u8[4096]{0}', space=vmem, size = 0x1000, scoped, tag = 'output window, operand 0, single buffered']
    #allocation3 [shape = 's32[1]{0}', space=sflag, size = 0x4, scoped, tag = 'scoped memory for tpu_custom_call.1']
    #allocation4 [shape = 'u8[512]{0}', space=vmem, size = 0x400, scoped, tag = 'output window, operand 1, single buffered']
    #allocation5 [shape = 's32[1]{0}', space=sflag, size = 0x4, scoped, tag = 'scoped memory for tpu_custom_call.1']
    %10 = vsyncpa [#allocation3], 0
    %11 = vsyncpa [#allocation5], 0
    // Predicated region
    $region2: #{tpu_custom_call.1} parent=1 // pred_check
      _
    $region3: #{tpu_custom_call.1} parent=1 // pred_check_branch
      %13 = sbr.rel (0) target = $region5
    $region4: #{tpu_custom_call.1} parent=1 // pred_region
      _
    $region5: #{tpu_custom_call.1} parent=1 // pred_fallthru
      _
    // Predicated region
    $region6: #{tpu_custom_call.1} parent=1 // pred_check
      _
    $region7: #{tpu_custom_call.1} parent=1 // pred_check_branch
      %15 = sbr.rel (0) target = $region9
    $region8: #{tpu_custom_call.1} parent=1 // pred_region
      _
    $region9: #{tpu_custom_call.1} parent=1 // pred_fallthru
      _
    // Predicated region
    $region10: #{tpu_custom_call.1} parent=1 // pred_check
      _
    $region11: #{tpu_custom_call.1} parent=1 // pred_check_branch
      %17 = sbr.rel (0) target = $region13
    $region12: #{tpu_custom_call.1} parent=1 // pred_region
      _
    $region13: #{tpu_custom_call.1} parent=1 // pred_fallthru
      _
    %v18 = vld [vmem:[%s0] sm:$0xff]
    %v19 = vld [vmem:[%s0 + $0x8] sm:$0xff]
    %v20 = vld [vmem:[%s0 + $0x10] sm:$0xff]
    %v21 = vld [vmem:[%s0 + $0x18] sm:$0xff]
    %v22 = vld [vmem:[%s1] sm:$0xff]
    %v23 = vld [vmem:[%s1 + $0x8] sm:$0xff]
    %v24 = vld [vmem:[%s1 + $0x10] sm:$0xff]
    %v25 = vld [vmem:[%s1 + $0x18] sm:$0xff]
    %v26 = vld [vmem:[%s2] sm:$0xff]
    %v27 = vld [vmem:[%s2 + $0x8] sm:$0x1]
    %vm28 = vcmask 72704
    %v30 = vsel %vm28, %v18, 0
    %v33 = vsel %vm28, %v19, 0
    %v36 = vsel %vm28, %v20, 0
    %v39 = vsel %vm28, %v21, 0
    %vm41 = vcmask 1040384
    %v43 = vsel %vm41, %v27, 0
    %45 = vmatprep.subr.mxu0 0.0
    %46 = vmatpush1.msra.mxu0 0.0
    %47 = vmatprep.subr.mxu0 0.0
    %48 = vmatpush1.msra.mxu0 0.0
    %49 = vmatprep.subr.mxu0 0.0
    %50 = vmatpush1.msra.mxu0 0.0
    %51 = vmatprep.subr.mxu0 0.0
    %52 = vmatpush1.msra.mxu0 0.0
    %53 = vmatprep.subr.mxu0 0.0
    %54 = vmatpush1.msra.mxu0 0.0
    %55 = vmatprep.subr.mxu0 0.0
    %56 = vmatpush1.msra.mxu0 0.0
    %57 = vmatprep.subr.mxu0 0.0
    %58 = vmatpush1.msra.mxu0 0.0
    %59 = vmatprep.subr.mxu0 0.0
    %60 = vmatpush1.msra.mxu0 0.0
    %61 = vmatprep.subr.mxu0 0.0
    %62 = vmatpush1.msra.mxu0 0.0
    %63 = vmatprep.subr.mxu0 0.0
    %64 = vmatpush1.msra.mxu0 0.0
    %65 = vmatprep.subr.mxu0 0.0
    %66 = vmatpush1.msra.mxu0 0.0
    %67 = vmatprep.subr.mxu0 0.0
    %68 = vmatpush1.msra.mxu0 0.0
    %69 = vmatprep.subr.mxu0 0.0
    %70 = vmatpush1.msra.mxu0 0.0
    %71 = vmatprep.subr.mxu0 0.0
    %72 = vmatpush1.msra.mxu0 0.0
    %73 = vmatprep.subr.mxu0 0.0
    %74 = vmatpush1.msra.mxu0 %v43
    %75 = vmatprep.subr.mxu0 0.0
    %76 = vmatpush1.msra.mxu0 %v26
    %77 = vmatprep.subr.mxu0 0.0
    %78 = vmatpush2.msra.mxu0 0.0
    %79 = vmatprep.subr.mxu0 0.0
    %80 = vmatpush2.msra.mxu0 0.0
    %81 = vmatprep.subr.mxu0 0.0
    %82 = vmatpush2.msra.mxu0 0.0
    %83 = vmatprep.subr.mxu0 0.0
    %84 = vmatpush2.msra.mxu0 0.0
    %85 = vmatprep.subr.mxu0 0.0
    %86 = vmatpush2.msra.mxu0 0.0
    %87 = vmatprep.subr.mxu0 0.0
    %88 = vmatpush2.msra.mxu0 0.0
    %89 = vmatprep.subr.mxu0 0.0
    %90 = vmatpush2.msra.mxu0 0.0
    %91 = vmatprep.subr.mxu0 0.0
    %92 = vmatpush2.msra.mxu0 0.0
    %93 = vmatprep.subr.mxu0 0.0
    %94 = vmatpush2.msra.mxu0 0.0
    %95 = vmatprep.subr.mxu0 0.0
    %96 = vmatpush2.msra.mxu0 0.0
    %97 = vmatprep.subr.mxu0 0.0
    %98 = vmatpush2.msra.mxu0 0.0
    %99 = vmatprep.subr.mxu0 0.0
    %100 = vmatpush2.msra.mxu0 0.0
    %101 = vmatprep.subr.mxu0 0.0
    %102 = vmatpush2.msra.mxu0 0.0
    %103 = vmatprep.subr.mxu0 0.0
    %104 = vmatpush2.msra.mxu0 0.0
    %105 = vmatprep.subr.mxu0 0.0
    %106 = vmatpush2.msra.mxu0 0.0
    %107 = vmatprep.subr.mxu0 0.0
    %108 = vmatpush2.msra.mxu0 0.0
    %109 = vmatprep.mubr.f32.mxu0 0.0
    %110 = vmatmul.mubr.f32.gmra.mxu0 %v30
    %v111 = vpop.f32.mrf.mxu0
    %v112 = vadd.f32 0.0, %v111
    %v113 = vpop.f32.mrf.mxu0
    %114 = vmatprep.mubr.f32.mxu0 0.0
    %115 = vmatmul.mubr.f32.gmra.mxu0 %v33
    %v116 = vpop.f32.mrf.mxu0
    %v117 = vadd.f32 0.0, %v116
    %v118 = vpop.f32.mrf.mxu0
    %119 = vmatprep.mubr.f32.mxu0 0.0
    %120 = vmatmul.mubr.f32.gmra.mxu0 %v36
    %v121 = vpop.f32.mrf.mxu0
    %v122 = vadd.f32 0.0, %v121
    %v123 = vpop.f32.mrf.mxu0
    %124 = vmatprep.mubr.f32.mxu0 0.0
    %125 = vmatmul.mubr.f32.gmra.mxu0 %v39
    %v126 = vpop.f32.mrf.mxu0
    %v127 = vadd.f32 0.0, %v126
    %v128 = vpop.f32.mrf.mxu0
    %129 = vdwg.mxu0
    %vm130 = vcmask 130048
    %v132 = vsel %vm130, %v22, 0
    %v135 = vsel %vm130, %v23, 0
    %137 = vmatprep.subr.mxu0 0.0
    %138 = vmatpush1.msra.mxu0 0.0
    %139 = vmatprep.subr.mxu0 0.0
    %140 = vmatpush1.msra.mxu0 0.0
    %141 = vmatprep.subr.mxu0 0.0
    %142 = vmatpush1.msra.mxu0 0.0
    %143 = vmatprep.subr.mxu0 0.0
    %144 = vmatpush1.msra.mxu0 0.0
    %145 = vmatprep.subr.mxu0 0.0
    %146 = vmatpush1.msra.mxu0 0.0
    %147 = vmatprep.subr.mxu0 0.0
    %148 = vmatpush1.msra.mxu0 0.0
    %149 = vmatprep.subr.mxu0 0.0
    %150 = vmatpush1.msra.mxu0 0.0
    %151 = vmatprep.subr.mxu0 0.0
    %152 = vmatpush1.msra.mxu0 0.0
    %153 = vmatprep.subr.mxu0 0.0
    %154 = vmatpush1.msra.mxu0 0.0
    %155 = vmatprep.subr.mxu0 0.0
    %156 = vmatpush1.msra.mxu0 0.0
    %157 = vmatprep.subr.mxu0 0.0
    %158 = vmatpush1.msra.mxu0 0.0
    %159 = vmatprep.subr.mxu0 0.0
    %160 = vmatpush1.msra.mxu0 0.0
    %161 = vmatprep.subr.mxu0 0.0
    %162 = vmatpush1.msra.mxu0 0.0
    %163 = vmatprep.subr.mxu0 0.0
    %164 = vmatpush1.msra.mxu0 0.0
    %165 = vmatprep.subr.mxu0 0.0
    %166 = vmatpush1.msra.mxu0 %v117
    %167 = vmatprep.subr.mxu0 0.0
    %168 = vmatpush1.msra.mxu0 %v112
    %169 = vmatprep.subr.mxu0 0.0
    %170 = vmatpush2.msra.mxu0 0.0
    %171 = vmatprep.subr.mxu0 0.0
    %172 = vmatpush2.msra.mxu0 0.0
    %173 = vmatprep.subr.mxu0 0.0
    %174 = vmatpush2.msra.mxu0 0.0
    %175 = vmatprep.subr.mxu0 0.0
    %176 = vmatpush2.msra.mxu0 0.0
    %177 = vmatprep.subr.mxu0 0.0
    %178 = vmatpush2.msra.mxu0 0.0
    %179 = vmatprep.subr.mxu0 0.0
    %180 = vmatpush2.msra.mxu0 0.0
    %181 = vmatprep.subr.mxu0 0.0
    %182 = vmatpush2.msra.mxu0 0.0
    %183 = vmatprep.subr.mxu0 0.0
    %184 = vmatpush2.msra.mxu0 0.0
    %185 = vmatprep.subr.mxu0 0.0
    %186 = vmatpush2.msra.mxu0 0.0
    %187 = vmatprep.subr.mxu0 0.0
    %188 = vmatpush2.msra.mxu0 0.0
    %189 = vmatprep.subr.mxu0 0.0
    %190 = vmatpush2.msra.mxu0 0.0
    %191 = vmatprep.subr.mxu0 0.0
    %192 = vmatpush2.msra.mxu0 0.0
    %193 = vmatprep.subr.mxu0 0.0
    %194 = vmatpush2.msra.mxu0 0.0
    %195 = vmatprep.subr.mxu0 0.0
    %196 = vmatpush2.msra.mxu0 0.0
    %197 = vmatprep.subr.mxu0 0.0
    %198 = vmatpush2.msra.mxu0 0.0
    %199 = vmatprep.subr.mxu0 0.0
    %200 = vmatpush2.msra.mxu0 0.0
    %201 = vmatprep.mubr.f32.mxu0 0.0
    %202 = vmatmul.mubr.f32.gmra.mxu0 %v132
    %v203 = vpop.f32.mrf.mxu0
    %v204 = vadd.f32 0.0, %v203
    %v205 = vpop.f32.mrf.mxu0
    %206 = vmatprep.mubr.f32.mxu0 0.0
    %207 = vmatmul.mubr.f32.gmra.mxu0 %v135
    %v208 = vpop.f32.mrf.mxu0
    %v209 = vadd.f32 0.0, %v208
    %v210 = vpop.f32.mrf.mxu0
    %211 = vdwg.mxu0
    %v213 = vsel %vm130, %v24, 0
    %v216 = vsel %vm130, %v25, 0
    %218 = vmatprep.subr.mxu0 0.0
    %219 = vmatpush1.msra.mxu0 0.0
    %220 = vmatprep.subr.mxu0 0.0
    %221 = vmatpush1.msra.mxu0 0.0
    %222 = vmatprep.subr.mxu0 0.0
    %223 = vmatpush1.msra.mxu0 0.0
    %224 = vmatprep.subr.mxu0 0.0
    %225 = vmatpush1.msra.mxu0 0.0
    %226 = vmatprep.subr.mxu0 0.0
    %227 = vmatpush1.msra.mxu0 0.0
    %228 = vmatprep.subr.mxu0 0.0
    %229 = vmatpush1.msra.mxu0 0.0
    %230 = vmatprep.subr.mxu0 0.0
    %231 = vmatpush1.msra.mxu0 0.0
    %232 = vmatprep.subr.mxu0 0.0
    %233 = vmatpush1.msra.mxu0 0.0
    %234 = vmatprep.subr.mxu0 0.0
    %235 = vmatpush1.msra.mxu0 0.0
    %236 = vmatprep.subr.mxu0 0.0
    %237 = vmatpush1.msra.mxu0 0.0
    %238 = vmatprep.subr.mxu0 0.0
    %239 = vmatpush1.msra.mxu0 0.0
    %240 = vmatprep.subr.mxu0 0.0
    %241 = vmatpush1.msra.mxu0 0.0
    %242 = vmatprep.subr.mxu0 0.0
    %243 = vmatpush1.msra.mxu0 0.0
    %244 = vmatprep.subr.mxu0 0.0
    %245 = vmatpush1.msra.mxu0 0.0
    %246 = vmatprep.subr.mxu0 0.0
    %247 = vmatpush1.msra.mxu0 %v127
    %248 = vmatprep.subr.mxu0 0.0
    %249 = vmatpush1.msra.mxu0 %v122
    %250 = vmatprep.subr.mxu0 0.0
    %251 = vmatpush2.msra.mxu0 0.0
    %252 = vmatprep.subr.mxu0 0.0
    %253 = vmatpush2.msra.mxu0 0.0
    %254 = vmatprep.subr.mxu0 0.0
    %255 = vmatpush2.msra.mxu0 0.0
    %256 = vmatprep.subr.mxu0 0.0
    %257 = vmatpush2.msra.mxu0 0.0
    %258 = vmatprep.subr.mxu0 0.0
    %259 = vmatpush2.msra.mxu0 0.0
    %260 = vmatprep.subr.mxu0 0.0
    %261 = vmatpush2.msra.mxu0 0.0
    %262 = vmatprep.subr.mxu0 0.0
    %263 = vmatpush2.msra.mxu0 0.0
    %264 = vmatprep.subr.mxu0 0.0
    %265 = vmatpush2.msra.mxu0 0.0
    %266 = vmatprep.subr.mxu0 0.0
    %267 = vmatpush2.msra.mxu0 0.0
    %268 = vmatprep.subr.mxu0 0.0
    %269 = vmatpush2.msra.mxu0 0.0
    %270 = vmatprep.subr.mxu0 0.0
    %271 = vmatpush2.msra.mxu0 0.0
    %272 = vmatprep.subr.mxu0 0.0
    %273 = vmatpush2.msra.mxu0 0.0
    %274 = vmatprep.subr.mxu0 0.0
    %275 = vmatpush2.msra.mxu0 0.0
    %276 = vmatprep.subr.mxu0 0.0
    %277 = vmatpush2.msra.mxu0 0.0
    %278 = vmatprep.subr.mxu0 0.0
    %279 = vmatpush2.msra.mxu0 0.0
    %280 = vmatprep.subr.mxu0 0.0
    %281 = vmatpush2.msra.mxu0 0.0
    %282 = vmatprep.mubr.f32.mxu0 0.0
    %283 = vmatmul.mubr.f32.gmra.mxu0 %v213
    %v284 = vpop.f32.mrf.mxu0
    %v285 = vadd.f32 0.0, %v284
    %v286 = vpop.f32.mrf.mxu0
    %287 = vmatprep.mubr.f32.mxu0 0.0
    %288 = vmatmul.mubr.f32.gmra.mxu0 %v216
    %v289 = vpop.f32.mrf.mxu0
    %v290 = vadd.f32 0.0, %v289
    %v291 = vpop.f32.mrf.mxu0
    %292 = vdwg.mxu0
    %v293 = vmax.f32 %v204, 1.0
    %v294 = vmax.f32 %v209, 1.0
    %v295 = vmax.f32 %v285, 1.0
    %v296 = vmax.f32 %v290, 1.0
    %298 = vset.pattern.permute.xlu0 4
    %299 = vperm.xlu0 %298, %v293
    %v300 = vpop.permute.xlu0 %299
    %303 = vset.pattern.permute.xlu0 4
    %304 = vperm.xlu0 %303, %v294
    %v305 = vpop.permute.xlu0 %304
    %308 = vset.pattern.permute.xlu0 4
    %309 = vperm.xlu0 %308, %v295
    %v310 = vpop.permute.xlu0 %309
    %313 = vset.pattern.permute.xlu0 4
    %314 = vperm.xlu0 %313, %v296
    %v315 = vpop.permute.xlu0 %314
    %v317 = vrcp.pop %v300
    %v318 = vmul.f32 %v204, %v317
    %v319 = vrcp.pop %v305
    %v320 = vmul.f32 %v209, %v319
    %v321 = vrcp.pop %v310
    %v322 = vmul.f32 %v285, %v321
    %v323 = vrcp.pop %v315
    %v324 = vmul.f32 %v290, %v323
    %329 = vrot.lane.b32.xlu0 %v112, 123
    %v330 = vpop.permute.xlu0 %329
    %331 = vrot.lane.b32.xlu0 %v117, 123
    %v332 = vpop.permute.xlu0 %331
    %333 = vrot.lane.b32.xlu0 %v122, 123
    %v334 = vpop.permute.xlu0 %333
    %335 = vrot.lane.b32.xlu0 %v127, 123
    %v336 = vpop.permute.xlu0 %335
    %v341 = vadd.f32 %v318, %v330
    %v342 = vadd.f32 %v320, %v332
    %v343 = vadd.f32 %v322, %v334
    %v344 = vadd.f32 %v324, %v336
    %vm345 = vcmask 31744
    %v346 = vsel %vm345, %v341, -inf
    %347 = vmax.xlane.f32.xlu0 %v346
    %v348 = vpop.xlane.xlu0 %347
    %v349 = vsel %vm345, %v342, -inf
    %350 = vmax.xlane.f32.xlu0 %v349
    %v351 = vpop.xlane.xlu0 %350
    %v352 = vsel %vm345, %v343, -inf
    %353 = vmax.xlane.f32.xlu0 %v352
    %v354 = vpop.xlane.xlu0 %353
    %v355 = vsel %vm345, %v344, -inf
    %356 = vmax.xlane.f32.xlu0 %v355
    %v357 = vpop.xlane.xlu0 %356
    %v358 = vsub.f32 %v341, %v348
    %v359 = vsub.f32 %v342, %v351
    %v360 = vsub.f32 %v343, %v354
    %v361 = vsub.f32 %v344, %v357
    %v362 = vmul.f32 %v358, 1.442695
    %v363 = vpow.pop %v362
    %v364 = vmul.f32 %v359, 1.442695
    %v365 = vpow.pop %v364
    %v366 = vmul.f32 %v360, 1.442695
    %v367 = vpow.pop %v366
    %v368 = vmul.f32 %v361, 1.442695
    %v369 = vpow.pop %v368
    %v370 = vsel %vm345, %v363, 0.0
    %371 = vadd.xlane.f32.xlu0 %v370
    %v372 = vpop.xlane.xlu0 %371
    %v373 = vsel %vm345, %v365, 0.0
    %374 = vadd.xlane.f32.xlu0 %v373
    %v375 = vpop.xlane.xlu0 %374
    %v376 = vsel %vm345, %v367, 0.0
    %377 = vadd.xlane.f32.xlu0 %v376
    %v378 = vpop.xlane.xlu0 %377
    %v379 = vsel %vm345, %v369, 0.0
    %380 = vadd.xlane.f32.xlu0 %v379
    %v381 = vpop.xlane.xlu0 %380
    %v382 = vrcp.pop %v372
    %v383 = vmul.f32 %v363, %v382
    %v384 = vrcp.pop %v375
    %v385 = vmul.f32 %v365, %v384
    %v386 = vrcp.pop %v378
    %v387 = vmul.f32 %v367, %v386
    %v388 = vrcp.pop %v381
    %v389 = vmul.f32 %v369, %v388
    %v390 = vsub.f32 0.0, %v383
    %v391 = vsub.f32 0.0, %v385
    %v392 = vsub.f32 0.0, %v387
    %v393 = vsub.f32 0.0, %v389
    %v394 = vadd.f32 %v383, 1e-15
    %v395 = vadd.f32 %v385, 1e-15
    %v396 = vadd.f32 %v387, 1e-15
    %v397 = vadd.f32 %v389, 1e-15
    %v398 = vlog2.pop %v394
    %v399 = vmul.f32 %v398, 0.6931472
    %v400 = vlog2.pop %v395
    %v401 = vmul.f32 %v400, 0.6931472
    %v402 = vlog2.pop %v396
    %v403 = vmul.f32 %v402, 0.6931472
    %v404 = vlog2.pop %v397
    %v405 = vmul.f32 %v404, 0.6931472
    %v406 = vmul.f32 %v390, %v399
    %v407 = vmul.f32 %v391, %v401
    %v408 = vmul.f32 %v392, %v403
    %v409 = vmul.f32 %v393, %v405
    %v410 = vsel %vm345, %v406, 0.0
    %v411 = vsel %vm345, %v407, 0.0
    %v412 = vadd.f32 %v410, %v411
    %v413 = vsel %vm345, %v408, 0.0
    %v414 = vadd.f32 %v412, %v413
    %v415 = vsel %vm345, %v409, 0.0
    %v416 = vadd.f32 %v414, %v415
    %417 = vadd.xlane.f32.xlu0 %v416
    %v418 = vpop.xlane.xlu0 %417
    %v419 = vrot.slane %v418, 4
    %v420 = vadd.f32 %v418, %v419
    %v421 = vrot.slane %v420, 2
    %v422 = vadd.f32 %v420, %v421
    %v423 = vrot.slane %v422, 1
    %v424 = vadd.f32 %v422, %v423
    %s425 = vtos %v424
    %430 = vrot.lane.b32.xlu0 %v383, 8
    %v431 = vpop.permute.xlu0 %430
    %432 = vrot.lane.b32.xlu0 %v385, 8
    %v433 = vpop.permute.xlu0 %432
    %434 = vrot.lane.b32.xlu0 %v387, 8
    %v435 = vpop.permute.xlu0 %434
    %436 = vrot.lane.b32.xlu0 %v389, 8
    %v437 = vpop.permute.xlu0 %436
    %vm442 = vcmask 64512
    %v443 = vsel %vm442, %v18, %v431
    %v444 = vsel %vm442, %v19, %v433
    %v445 = vsel %vm442, %v20, %v435
    %v446 = vsel %vm442, %v21, %v437
    %447 = vxpose.xlu0.b32.start [1/16] %v383, 128
    %448 = vxpose.xlu0.b32.cont [2/16] %v385, 128
    %449 = vxpose.xlu0.b32.cont [3/16] 0.0, 128
    %450 = vxpose.xlu0.b32.cont [4/16] 0.0, 128
    %451 = vxpose.xlu0.b32.cont [5/16] 0.0, 128
    %452 = vxpose.xlu0.b32.cont [6/16] 0.0, 128
    %453 = vxpose.xlu0.b32.cont [7/16] 0.0, 128
    %454 = vxpose.xlu0.b32.cont [8/16] 0.0, 128
    %455 = vxpose.xlu0.b32.cont [9/16] 0.0, 128
    %456 = vxpose.xlu0.b32.cont [10/16] 0.0, 128
    %457 = vxpose.xlu0.b32.cont [11/16] 0.0, 128
    %458 = vxpose.xlu0.b32.cont [12/16] 0.0, 128
    %459 = vxpose.xlu0.b32.cont [13/16] 0.0, 128
    %460 = vxpose.xlu0.b32.cont [14/16] 0.0, 128
    %461 = vxpose.xlu0.b32.cont [15/16] 0.0, 128
    %462 = vxpose.xlu0.b32.end [16/16] 0.0, 128
    %v463 = vpop.trf.xlu0
    %v464 = vpop.trf.xlu0
    %v465 = vpop.trf.xlu0
    %v466 = vpop.trf.xlu0
    %v467 = vpop.trf.xlu0
    %v468 = vpop.trf.xlu0
    %v469 = vpop.trf.xlu0
    %v470 = vpop.trf.xlu0
    %v471 = vpop.trf.xlu0
    %v472 = vpop.trf.xlu0
    %v473 = vpop.trf.xlu0
    %v474 = vpop.trf.xlu0
    %v475 = vpop.trf.xlu0
    %v476 = vpop.trf.xlu0
    %v477 = vpop.trf.xlu0
    %v478 = vpop.trf.xlu0
    %v480 = vsel %vm130, %v463, 0
    %482 = vmatprep.subr.mxu0 0.0
    %483 = vmatpush1.msra.mxu0 0.0
    %484 = vmatprep.subr.mxu0 0.0
    %485 = vmatpush1.msra.mxu0 0.0
    %486 = vmatprep.subr.mxu0 0.0
    %487 = vmatpush1.msra.mxu0 0.0
    %488 = vmatprep.subr.mxu0 0.0
    %489 = vmatpush1.msra.mxu0 0.0
    %490 = vmatprep.subr.mxu0 0.0
    %491 = vmatpush1.msra.mxu0 0.0
    %492 = vmatprep.subr.mxu0 0.0
    %493 = vmatpush1.msra.mxu0 0.0
    %494 = vmatprep.subr.mxu0 0.0
    %495 = vmatpush1.msra.mxu0 0.0
    %496 = vmatprep.subr.mxu0 0.0
    %497 = vmatpush1.msra.mxu0 0.0
    %498 = vmatprep.subr.mxu0 0.0
    %499 = vmatpush1.msra.mxu0 0.0
    %500 = vmatprep.subr.mxu0 0.0
    %501 = vmatpush1.msra.mxu0 0.0
    %502 = vmatprep.subr.mxu0 0.0
    %503 = vmatpush1.msra.mxu0 0.0
    %504 = vmatprep.subr.mxu0 0.0
    %505 = vmatpush1.msra.mxu0 0.0
    %506 = vmatprep.subr.mxu0 0.0
    %507 = vmatpush1.msra.mxu0 0.0
    %508 = vmatprep.subr.mxu0 0.0
    %509 = vmatpush1.msra.mxu0 0.0
    %510 = vmatprep.subr.mxu0 0.0
    %511 = vmatpush1.msra.mxu0 %v444
    %512 = vmatprep.subr.mxu0 0.0
    %513 = vmatpush1.msra.mxu0 %v443
    %514 = vmatprep.subr.mxu0 0.0
    %515 = vmatpush2.msra.mxu0 0.0
    %516 = vmatprep.subr.mxu0 0.0
    %517 = vmatpush2.msra.mxu0 0.0
    %518 = vmatprep.subr.mxu0 0.0
    %519 = vmatpush2.msra.mxu0 0.0
    %520 = vmatprep.subr.mxu0 0.0
    %521 = vmatpush2.msra.mxu0 0.0
    %522 = vmatprep.subr.mxu0 0.0
    %523 = vmatpush2.msra.mxu0 0.0
    %524 = vmatprep.subr.mxu0 0.0
    %525 = vmatpush2.msra.mxu0 0.0
    %526 = vmatprep.subr.mxu0 0.0
    %527 = vmatpush2.msra.mxu0 0.0
    %528 = vmatprep.subr.mxu0 0.0
    %529 = vmatpush2.msra.mxu0 0.0
    %530 = vmatprep.subr.mxu0 0.0
    %531 = vmatpush2.msra.mxu0 0.0
    %532 = vmatprep.subr.mxu0 0.0
    %533 = vmatpush2.msra.mxu0 0.0
    %534 = vmatprep.subr.mxu0 0.0
    %535 = vmatpush2.msra.mxu0 0.0
    %536 = vmatprep.subr.mxu0 0.0
    %537 = vmatpush2.msra.mxu0 0.0
    %538 = vmatprep.subr.mxu0 0.0
    %539 = vmatpush2.msra.mxu0 0.0
    %540 = vmatprep.subr.mxu0 0.0
    %541 = vmatpush2.msra.mxu0 0.0
    %542 = vmatprep.subr.mxu0 0.0
    %543 = vmatpush2.msra.mxu0 0.0
    %544 = vmatprep.subr.mxu0 0.0
    %545 = vmatpush2.msra.mxu0 0.0
    %546 = vmatprep.mubr.f32.mxu0 0.0
    %547 = vmatmul.mubr.f32.gmra.mxu0 %v480
    %v548 = vpop.f32.mrf.mxu0
    %v549 = vadd.f32 0.0, %v548
    %v550 = vpop.f32.mrf.mxu0
    %551 = vdwg.mxu0
    %552 = vxpose.xlu0.b32.start [1/16] %v387, 128
    %553 = vxpose.xlu0.b32.cont [2/16] %v389, 128
    %554 = vxpose.xlu0.b32.cont [3/16] 0.0, 128
    %555 = vxpose.xlu0.b32.cont [4/16] 0.0, 128
    %556 = vxpose.xlu0.b32.cont [5/16] 0.0, 128
    %557 = vxpose.xlu0.b32.cont [6/16] 0.0, 128
    %558 = vxpose.xlu0.b32.cont [7/16] 0.0, 128
    %559 = vxpose.xlu0.b32.cont [8/16] 0.0, 128
    %560 = vxpose.xlu0.b32.cont [9/16] 0.0, 128
    %561 = vxpose.xlu0.b32.cont [10/16] 0.0, 128
    %562 = vxpose.xlu0.b32.cont [11/16] 0.0, 128
    %563 = vxpose.xlu0.b32.cont [12/16] 0.0, 128
    %564 = vxpose.xlu0.b32.cont [13/16] 0.0, 128
    %565 = vxpose.xlu0.b32.cont [14/16] 0.0, 128
    %566 = vxpose.xlu0.b32.cont [15/16] 0.0, 128
    %567 = vxpose.xlu0.b32.end [16/16] 0.0, 128
    %v568 = vpop.trf.xlu0
    %v569 = vpop.trf.xlu0
    %v570 = vpop.trf.xlu0
    %v571 = vpop.trf.xlu0
    %v572 = vpop.trf.xlu0
    %v573 = vpop.trf.xlu0
    %v574 = vpop.trf.xlu0
    %v575 = vpop.trf.xlu0
    %v576 = vpop.trf.xlu0
    %v577 = vpop.trf.xlu0
    %v578 = vpop.trf.xlu0
    %v579 = vpop.trf.xlu0
    %v580 = vpop.trf.xlu0
    %v581 = vpop.trf.xlu0
    %v582 = vpop.trf.xlu0
    %v583 = vpop.trf.xlu0
    %v585 = vsel %vm130, %v568, 0
    %587 = vmatprep.subr.mxu0 0.0
    %588 = vmatpush1.msra.mxu0 0.0
    %589 = vmatprep.subr.mxu0 0.0
    %590 = vmatpush1.msra.mxu0 0.0
    %591 = vmatprep.subr.mxu0 0.0
    %592 = vmatpush1.msra.mxu0 0.0
    %593 = vmatprep.subr.mxu0 0.0
    %594 = vmatpush1.msra.mxu0 0.0
    %595 = vmatprep.subr.mxu0 0.0
    %596 = vmatpush1.msra.mxu0 0.0
    %597 = vmatprep.subr.mxu0 0.0
    %598 = vmatpush1.msra.mxu0 0.0
    %599 = vmatprep.subr.mxu0 0.0
    %600 = vmatpush1.msra.mxu0 0.0
    %601 = vmatprep.subr.mxu0 0.0
    %602 = vmatpush1.msra.mxu0 0.0
    %603 = vmatprep.subr.mxu0 0.0
    %604 = vmatpush1.msra.mxu0 0.0
    %605 = vmatprep.subr.mxu0 0.0
    %606 = vmatpush1.msra.mxu0 0.0
    %607 = vmatprep.subr.mxu0 0.0
    %608 = vmatpush1.msra.mxu0 0.0
    %609 = vmatprep.subr.mxu0 0.0
    %610 = vmatpush1.msra.mxu0 0.0
    %611 = vmatprep.subr.mxu0 0.0
    %612 = vmatpush1.msra.mxu0 0.0
    %613 = vmatprep.subr.mxu0 0.0
    %614 = vmatpush1.msra.mxu0 0.0
    %615 = vmatprep.subr.mxu0 0.0
    %616 = vmatpush1.msra.mxu0 %v446
    %617 = vmatprep.subr.mxu0 0.0
    %618 = vmatpush1.msra.mxu0 %v445
    %619 = vmatprep.subr.mxu0 0.0
    %620 = vmatpush2.msra.mxu0 0.0
    %621 = vmatprep.subr.mxu0 0.0
    %622 = vmatpush2.msra.mxu0 0.0
    %623 = vmatprep.subr.mxu0 0.0
    %624 = vmatpush2.msra.mxu0 0.0
    %625 = vmatprep.subr.mxu0 0.0
    %626 = vmatpush2.msra.mxu0 0.0
    %627 = vmatprep.subr.mxu0 0.0
    %628 = vmatpush2.msra.mxu0 0.0
    %629 = vmatprep.subr.mxu0 0.0
    %630 = vmatpush2.msra.mxu0 0.0
    %631 = vmatprep.subr.mxu0 0.0
    %632 = vmatpush2.msra.mxu0 0.0
    %633 = vmatprep.subr.mxu0 0.0
    %634 = vmatpush2.msra.mxu0 0.0
    %635 = vmatprep.subr.mxu0 0.0
    %636 = vmatpush2.msra.mxu0 0.0
    %637 = vmatprep.subr.mxu0 0.0
    %638 = vmatpush2.msra.mxu0 0.0
    %639 = vmatprep.subr.mxu0 0.0
    %640 = vmatpush2.msra.mxu0 0.0
    %641 = vmatprep.subr.mxu0 0.0
    %642 = vmatpush2.msra.mxu0 0.0
    %643 = vmatprep.subr.mxu0 0.0
    %644 = vmatpush2.msra.mxu0 0.0
    %645 = vmatprep.subr.mxu0 0.0
    %646 = vmatpush2.msra.mxu0 0.0
    %647 = vmatprep.subr.mxu0 0.0
    %648 = vmatpush2.msra.mxu0 0.0
    %649 = vmatprep.subr.mxu0 0.0
    %650 = vmatpush2.msra.mxu0 0.0
    %651 = vmatprep.mubr.f32.mxu0 0.0
    %652 = vmatmul.mubr.f32.gmra.mxu0 %v585
    %v653 = vpop.f32.mrf.mxu0
    %v654 = vadd.f32 0.0, %v653
    %v655 = vpop.f32.mrf.mxu0
    %656 = vdwg.mxu0
    %657 = vmatprep.subr.mxu0 0.0
    %658 = vmatpush1.msra.mxu0 0.0
    %659 = vmatprep.subr.mxu0 0.0
    %660 = vmatpush1.msra.mxu0 0.0
    %661 = vmatprep.subr.mxu0 0.0
    %662 = vmatpush1.msra.mxu0 0.0
    %663 = vmatprep.subr.mxu0 0.0
    %664 = vmatpush1.msra.mxu0 0.0
    %665 = vmatprep.subr.mxu0 0.0
    %666 = vmatpush1.msra.mxu0 0.0
    %667 = vmatprep.subr.mxu0 0.0
    %668 = vmatpush1.msra.mxu0 0.0
    %669 = vmatprep.subr.mxu0 0.0
    %670 = vmatpush1.msra.mxu0 0.0
    %671 = vmatprep.subr.mxu0 0.0
    %672 = vmatpush1.msra.mxu0 0.0
    %673 = vmatprep.subr.mxu0 0.0
    %674 = vmatpush1.msra.mxu0 0.0
    %675 = vmatprep.subr.mxu0 0.0
    %676 = vmatpush1.msra.mxu0 0.0
    %677 = vmatprep.subr.mxu0 0.0
    %678 = vmatpush1.msra.mxu0 0.0
    %679 = vmatprep.subr.mxu0 0.0
    %680 = vmatpush1.msra.mxu0 0.0
    %681 = vmatprep.subr.mxu0 0.0
    %682 = vmatpush1.msra.mxu0 0.0
    %683 = vmatprep.subr.mxu0 0.0
    %684 = vmatpush1.msra.mxu0 0.0
    %685 = vmatprep.subr.mxu0 0.0
    %686 = vmatpush1.msra.mxu0 %v23
    %687 = vmatprep.subr.mxu0 0.0
    %688 = vmatpush1.msra.mxu0 %v22
    %689 = vmatprep.subr.mxu0 0.0
    %690 = vmatpush2.msra.mxu0 0.0
    %691 = vmatprep.subr.mxu0 0.0
    %692 = vmatpush2.msra.mxu0 0.0
    %693 = vmatprep.subr.mxu0 0.0
    %694 = vmatpush2.msra.mxu0 0.0
    %695 = vmatprep.subr.mxu0 0.0
    %696 = vmatpush2.msra.mxu0 0.0
    %697 = vmatprep.subr.mxu0 0.0
    %698 = vmatpush2.msra.mxu0 0.0
    %699 = vmatprep.subr.mxu0 0.0
    %700 = vmatpush2.msra.mxu0 0.0
    %701 = vmatprep.subr.mxu0 0.0
    %702 = vmatpush2.msra.mxu0 0.0
    %703 = vmatprep.subr.mxu0 0.0
    %704 = vmatpush2.msra.mxu0 0.0
    %705 = vmatprep.subr.mxu0 0.0
    %706 = vmatpush2.msra.mxu0 0.0
    %707 = vmatprep.subr.mxu0 0.0
    %708 = vmatpush2.msra.mxu0 0.0
    %709 = vmatprep.subr.mxu0 0.0
    %710 = vmatpush2.msra.mxu0 0.0
    %711 = vmatprep.subr.mxu0 0.0
    %712 = vmatpush2.msra.mxu0 0.0
    %713 = vmatprep.subr.mxu0 0.0
    %714 = vmatpush2.msra.mxu0 0.0
    %715 = vmatprep.subr.mxu0 0.0
    %716 = vmatpush2.msra.mxu0 0.0
    %717 = vmatprep.subr.mxu0 0.0
    %718 = vmatpush2.msra.mxu0 0.0
    %719 = vmatprep.subr.mxu0 0.0
    %720 = vmatpush2.msra.mxu0 0.0
    %721 = vmatprep.mubr.f32.mxu0 0.0
    %722 = vmatmul.mubr.f32.gmra.mxu0 %v480
    %v723 = vpop.f32.mrf.mxu0
    %v724 = vadd.f32 0.0, %v723
    %v725 = vpop.f32.mrf.mxu0
    %726 = vdwg.mxu0
    %727 = vmatprep.subr.mxu0 0.0
    %728 = vmatpush1.msra.mxu0 0.0
    %729 = vmatprep.subr.mxu0 0.0
    %730 = vmatpush1.msra.mxu0 0.0
    %731 = vmatprep.subr.mxu0 0.0
    %732 = vmatpush1.msra.mxu0 0.0
    %733 = vmatprep.subr.mxu0 0.0
    %734 = vmatpush1.msra.mxu0 0.0
    %735 = vmatprep.subr.mxu0 0.0
    %736 = vmatpush1.msra.mxu0 0.0
    %737 = vmatprep.subr.mxu0 0.0
    %738 = vmatpush1.msra.mxu0 0.0
    %739 = vmatprep.subr.mxu0 0.0
    %740 = vmatpush1.msra.mxu0 0.0
    %741 = vmatprep.subr.mxu0 0.0
    %742 = vmatpush1.msra.mxu0 0.0
    %743 = vmatprep.subr.mxu0 0.0
    %744 = vmatpush1.msra.mxu0 0.0
    %745 = vmatprep.subr.mxu0 0.0
    %746 = vmatpush1.msra.mxu0 0.0
    %747 = vmatprep.subr.mxu0 0.0
    %748 = vmatpush1.msra.mxu0 0.0
    %749 = vmatprep.subr.mxu0 0.0
    %750 = vmatpush1.msra.mxu0 0.0
    %751 = vmatprep.subr.mxu0 0.0
    %752 = vmatpush1.msra.mxu0 0.0
    %753 = vmatprep.subr.mxu0 0.0
    %754 = vmatpush1.msra.mxu0 0.0
    %755 = vmatprep.subr.mxu0 0.0
    %756 = vmatpush1.msra.mxu0 %v25
    %757 = vmatprep.subr.mxu0 0.0
    %758 = vmatpush1.msra.mxu0 %v24
    %759 = vmatprep.subr.mxu0 0.0
    %760 = vmatpush2.msra.mxu0 0.0
    %761 = vmatprep.subr.mxu0 0.0
    %762 = vmatpush2.msra.mxu0 0.0
    %763 = vmatprep.subr.mxu0 0.0
    %764 = vmatpush2.msra.mxu0 0.0
    %765 = vmatprep.subr.mxu0 0.0
    %766 = vmatpush2.msra.mxu0 0.0
    %767 = vmatprep.subr.mxu0 0.0
    %768 = vmatpush2.msra.mxu0 0.0
    %769 = vmatprep.subr.mxu0 0.0
    %770 = vmatpush2.msra.mxu0 0.0
    %771 = vmatprep.subr.mxu0 0.0
    %772 = vmatpush2.msra.mxu0 0.0
    %773 = vmatprep.subr.mxu0 0.0
    %774 = vmatpush2.msra.mxu0 0.0
    %775 = vmatprep.subr.mxu0 0.0
    %776 = vmatpush2.msra.mxu0 0.0
    %777 = vmatprep.subr.mxu0 0.0
    %778 = vmatpush2.msra.mxu0 0.0
    %779 = vmatprep.subr.mxu0 0.0
    %780 = vmatpush2.msra.mxu0 0.0
    %781 = vmatprep.subr.mxu0 0.0
    %782 = vmatpush2.msra.mxu0 0.0
    %783 = vmatprep.subr.mxu0 0.0
    %784 = vmatpush2.msra.mxu0 0.0
    %785 = vmatprep.subr.mxu0 0.0
    %786 = vmatpush2.msra.mxu0 0.0
    %787 = vmatprep.subr.mxu0 0.0
    %788 = vmatpush2.msra.mxu0 0.0
    %789 = vmatprep.subr.mxu0 0.0
    %790 = vmatpush2.msra.mxu0 0.0
    %791 = vmatprep.mubr.f32.mxu0 0.0
    %792 = vmatmul.mubr.f32.gmra.mxu0 %v585
    %v793 = vpop.f32.mrf.mxu0
    %v794 = vadd.f32 0.0, %v793
    %v795 = vpop.f32.mrf.mxu0
    %796 = vdwg.mxu0
    %v798 = vsel %vm130, %v724, 0
    %800 = vmatprep.subr.mxu0 0.0
    %801 = vmatpush1.msra.mxu0 0.0
    %802 = vmatprep.subr.mxu0 0.0
    %803 = vmatpush1.msra.mxu0 0.0
    %804 = vmatprep.subr.mxu0 0.0
    %805 = vmatpush1.msra.mxu0 0.0
    %806 = vmatprep.subr.mxu0 0.0
    %807 = vmatpush1.msra.mxu0 0.0
    %808 = vmatprep.subr.mxu0 0.0
    %809 = vmatpush1.msra.mxu0 0.0
    %810 = vmatprep.subr.mxu0 0.0
    %811 = vmatpush1.msra.mxu0 0.0
    %812 = vmatprep.subr.mxu0 0.0
    %813 = vmatpush1.msra.mxu0 0.0
    %814 = vmatprep.subr.mxu0 0.0
    %815 = vmatpush1.msra.mxu0 0.0
    %816 = vmatprep.subr.mxu0 0.0
    %817 = vmatpush1.msra.mxu0 0.0
    %818 = vmatprep.subr.mxu0 0.0
    %819 = vmatpush1.msra.mxu0 0.0
    %820 = vmatprep.subr.mxu0 0.0
    %821 = vmatpush1.msra.mxu0 0.0
    %822 = vmatprep.subr.mxu0 0.0
    %823 = vmatpush1.msra.mxu0 0.0
    %824 = vmatprep.subr.mxu0 0.0
    %825 = vmatpush1.msra.mxu0 0.0
    %826 = vmatprep.subr.mxu0 0.0
    %827 = vmatpush1.msra.mxu0 0.0
    %828 = vmatprep.subr.mxu0 0.0
    %829 = vmatpush1.msra.mxu0 %v385
    %830 = vmatprep.subr.mxu0 0.0
    %831 = vmatpush1.msra.mxu0 %v383
    %832 = vmatprep.subr.mxu0 0.0
    %833 = vmatpush2.msra.mxu0 0.0
    %834 = vmatprep.subr.mxu0 0.0
    %835 = vmatpush2.msra.mxu0 0.0
    %836 = vmatprep.subr.mxu0 0.0
    %837 = vmatpush2.msra.mxu0 0.0
    %838 = vmatprep.subr.mxu0 0.0
    %839 = vmatpush2.msra.mxu0 0.0
    %840 = vmatprep.subr.mxu0 0.0
    %841 = vmatpush2.msra.mxu0 0.0
    %842 = vmatprep.subr.mxu0 0.0
    %843 = vmatpush2.msra.mxu0 0.0
    %844 = vmatprep.subr.mxu0 0.0
    %845 = vmatpush2.msra.mxu0 0.0
    %846 = vmatprep.subr.mxu0 0.0
    %847 = vmatpush2.msra.mxu0 0.0
    %848 = vmatprep.subr.mxu0 0.0
    %849 = vmatpush2.msra.mxu0 0.0
    %850 = vmatprep.subr.mxu0 0.0
    %851 = vmatpush2.msra.mxu0 0.0
    %852 = vmatprep.subr.mxu0 0.0
    %853 = vmatpush2.msra.mxu0 0.0
    %854 = vmatprep.subr.mxu0 0.0
    %855 = vmatpush2.msra.mxu0 0.0
    %856 = vmatprep.subr.mxu0 0.0
    %857 = vmatpush2.msra.mxu0 0.0
    %858 = vmatprep.subr.mxu0 0.0
    %859 = vmatpush2.msra.mxu0 0.0
    %860 = vmatprep.subr.mxu0 0.0
    %861 = vmatpush2.msra.mxu0 0.0
    %862 = vmatprep.subr.mxu0 0.0
    %863 = vmatpush2.msra.mxu0 0.0
    %864 = vmatprep.mubr.f32.mxu0 0.0
    %865 = vmatmul.mubr.f32.gmra.mxu0 %v798
    %v866 = vpop.f32.mrf.mxu0
    %v867 = vadd.f32 0.0, %v866
    %v868 = vpop.f32.mrf.mxu0
    %869 = vdwg.mxu0
    %v871 = vsel %vm130, %v794, 0
    %873 = vmatprep.subr.mxu0 0.0
    %874 = vmatpush1.msra.mxu0 0.0
    %875 = vmatprep.subr.mxu0 0.0
    %876 = vmatpush1.msra.mxu0 0.0
    %877 = vmatprep.subr.mxu0 0.0
    %878 = vmatpush1.msra.mxu0 0.0
    %879 = vmatprep.subr.mxu0 0.0
    %880 = vmatpush1.msra.mxu0 0.0
    %881 = vmatprep.subr.mxu0 0.0
    %882 = vmatpush1.msra.mxu0 0.0
    %883 = vmatprep.subr.mxu0 0.0
    %884 = vmatpush1.msra.mxu0 0.0
    %885 = vmatprep.subr.mxu0 0.0
    %886 = vmatpush1.msra.mxu0 0.0
    %887 = vmatprep.subr.mxu0 0.0
    %888 = vmatpush1.msra.mxu0 0.0
    %889 = vmatprep.subr.mxu0 0.0
    %890 = vmatpush1.msra.mxu0 0.0
    %891 = vmatprep.subr.mxu0 0.0
    %892 = vmatpush1.msra.mxu0 0.0
    %893 = vmatprep.subr.mxu0 0.0
    %894 = vmatpush1.msra.mxu0 0.0
    %895 = vmatprep.subr.mxu0 0.0
    %896 = vmatpush1.msra.mxu0 0.0
    %897 = vmatprep.subr.mxu0 0.0
    %898 = vmatpush1.msra.mxu0 0.0
    %899 = vmatprep.subr.mxu0 0.0
    %900 = vmatpush1.msra.mxu0 0.0
    %901 = vmatprep.subr.mxu0 0.0
    %902 = vmatpush1.msra.mxu0 %v389
    %903 = vmatprep.subr.mxu0 0.0
    %904 = vmatpush1.msra.mxu0 %v387
    %905 = vmatprep.subr.mxu0 0.0
    %906 = vmatpush2.msra.mxu0 0.0
    %907 = vmatprep.subr.mxu0 0.0
    %908 = vmatpush2.msra.mxu0 0.0
    %909 = vmatprep.subr.mxu0 0.0
    %910 = vmatpush2.msra.mxu0 0.0
    %911 = vmatprep.subr.mxu0 0.0
    %912 = vmatpush2.msra.mxu0 0.0
    %913 = vmatprep.subr.mxu0 0.0
    %914 = vmatpush2.msra.mxu0 0.0
    %915 = vmatprep.subr.mxu0 0.0
    %916 = vmatpush2.msra.mxu0 0.0
    %917 = vmatprep.subr.mxu0 0.0
    %918 = vmatpush2.msra.mxu0 0.0
    %919 = vmatprep.subr.mxu0 0.0
    %920 = vmatpush2.msra.mxu0 0.0
    %921 = vmatprep.subr.mxu0 0.0
    %922 = vmatpush2.msra.mxu0 0.0
    %923 = vmatprep.subr.mxu0 0.0
    %924 = vmatpush2.msra.mxu0 0.0
    %925 = vmatprep.subr.mxu0 0.0
    %926 = vmatpush2.msra.mxu0 0.0
    %927 = vmatprep.subr.mxu0 0.0
    %928 = vmatpush2.msra.mxu0 0.0
    %929 = vmatprep.subr.mxu0 0.0
    %930 = vmatpush2.msra.mxu0 0.0
    %931 = vmatprep.subr.mxu0 0.0
    %932 = vmatpush2.msra.mxu0 0.0
    %933 = vmatprep.subr.mxu0 0.0
    %934 = vmatpush2.msra.mxu0 0.0
    %935 = vmatprep.subr.mxu0 0.0
    %936 = vmatpush2.msra.mxu0 0.0
    %937 = vmatprep.mubr.f32.mxu0 0.0
    %938 = vmatmul.mubr.f32.gmra.mxu0 %v871
    %v939 = vpop.f32.mrf.mxu0
    %v940 = vadd.f32 0.0, %v939
    %v941 = vpop.f32.mrf.mxu0
    %942 = vdwg.mxu0
    %945 = vrot.lane.b32.xlu0 %v867, 8
    %v946 = vpop.permute.xlu0 %945
    %947 = vrot.lane.b32.xlu0 %v940, 8
    %v948 = vpop.permute.xlu0 %947
    %v951 = vsel %vm442, %v549, %v946
    %v952 = vsel %vm442, %v654, %v948
    %vm953 = vcmask 93184
    %954 = vst.msk [vmem:[#allocation2] sm:$0xf] %vm953, %v951
    %955 = vst.msk [vmem:[#allocation2 + $0x4] sm:$0xf] %vm953, %v952
    %v956 = vlaneseq
    %v957 = vshrl.u32 %v956, 7
    %v958 = vlaneseq
    %v959 = vand.u32 %v958, 127
    %vm960 = vcmp.eq.s32.totalorder %v957, %v959
    %v961 = vsel %vm960, 1, 0
    %v962 = vcvt.s32.f32 %v961
    %v963 = vmul.f32 %v867, %v962
    %v964 = vmul.f32 %v940, %v962
    %vm965 = vcmask 27648
    %v966 = vsel %vm965, %v963, 0.0
    %v967 = vsel %vm965, %v964, 0.0
    %v968 = vadd.f32 %v966, %v967
    %969 = vadd.xlane.f32.xlu0 %v968
    %v970 = vpop.xlane.xlu0 %969
    %v971 = vrot.slane %v970, 4
    %v972 = vadd.f32 %v970, %v971
    %v973 = vrot.slane %v972, 2
    %v974 = vadd.f32 %v972, %v973
    %v975 = vrot.slane %v974, 1
    %v976 = vadd.f32 %v974, %v975
    %s977 = vtos %v976
    %v978 = vmul.f32 %v22, %v22
    %v979 = vmul.f32 %v23, %v23
    %v980 = vmul.f32 %v24, %v24
    %v981 = vmul.f32 %v25, %v25
    %v982 = vsel %vm130, %v978, 0.0
    %v983 = vsel %vm130, %v979, 0.0
    %v984 = vadd.f32 %v982, %v983
    %v985 = vsel %vm130, %v980, 0.0
    %v986 = vadd.f32 %v984, %v985
    %v987 = vsel %vm130, %v981, 0.0
    %v988 = vadd.f32 %v986, %v987
    %989 = vadd.xlane.f32.xlu0 %v988
    %v990 = vpop.xlane.xlu0 %989
    %v991 = vrot.slane %v990, 4
    %v992 = vadd.f32 %v990, %v991
    %v993 = vrot.slane %v992, 2
    %v994 = vadd.f32 %v992, %v993
    %v995 = vrot.slane %v994, 1
    %v996 = vadd.f32 %v994, %v995
    %s997 = vtos %v996
    %s998 = smul.f32 %s977, 2.0
    %s999 = ssub.f32 %s997, %s998
    %v1000 = vmul.f32 %v549, %v549
    %v1001 = vmul.f32 %v654, %v654
    %1004 = vrot.lane.b32.xlu0 %v1000, 120
    %v1005 = vpop.permute.xlu0 %1004
    %1006 = vrot.lane.b32.xlu0 %v1001, 120
    %v1007 = vpop.permute.xlu0 %1006
    %v1010 = vsel %vm965, %v1005, 0.0
    %v1011 = vsel %vm965, %v1007, 0.0
    %v1012 = vadd.f32 %v1010, %v1011
    %1013 = vadd.xlane.f32.xlu0 %v1012
    %v1014 = vpop.xlane.xlu0 %1013
    %v1015 = vrot.slane %v1014, 4
    %v1016 = vadd.f32 %v1014, %v1015
    %v1017 = vrot.slane %v1016, 2
    %v1018 = vadd.f32 %v1016, %v1017
    %v1019 = vrot.slane %v1018, 1
    %v1020 = vadd.f32 %v1018, %v1019
    %s1021 = vtos %v1020
    %s1022 = sadd.f32 %s999, %s1021
    %s1023 = smax.f32 %s1022, 0.0
    %v1024 = vstv %s1023
    %v1025 = vrsqrt.pop %v1024
    %v1026 = vmul.f32 %v1024, %v1025
    %vm1027 = vcmp.eq.f32.partialorder %v1024, inf
    %v1028 = vsel %vm1027, %v1024, %v1026
    %vm1029 = vcmp.eq.f32.partialorder %v1024, 0.0
    %v1030 = vand.u32 %v1024, 2147483648
    %v1031 = vsel %vm1029, %v1030, %v1028
    %s1032 = vtos %v1031
    %v1033 = vrcp.pop 512.0
    %s1034 = vtos %v1033
    %s1035 = smul.f32 %s1032, %s1034
    %v1036 = vrcp.pop 32.0
    %s1037 = vtos %v1036
    %s1038 = smul.f32 %s425, %s1037
    %vm1039 = vcmp.eq.s32.totalorder %v959, 0
    %v1040 = vstv %s1035
    %v1041 = vstv %s1038
    %v1042 = vsel %vm1039, %v1040, %v1041
    %vm1043 = vcmask 8192
    %1044 = vst.msk [vmem:[#allocation4] sm:$0x1] %vm1043, %v1042
    // Predicated region
    $region14: #{tpu_custom_call.1} parent=1 // pred_check
      _
    $region15: #{tpu_custom_call.1} parent=1 // pred_check_branch
      %1046 = sbr.rel (0) target = $region17
    $region16: #{tpu_custom_call.1} parent=1 // pred_region
      %s1048 = ssub.s32 128, 128
      %1049 = vsyncadd [#allocation3], %s1048
      %s1050 = sshll.u32 [#allocation2], 4
      %s1051 = int_to_ptr.vmem [resolvable:$true] %s1050
      %1056 = dma.vmem_to_hbm [thread:$0]  %s1051, 128, %s3, [#allocation3], 64, 64, 4
    $region17: #{tpu_custom_call.1} parent=1 // pred_fallthru
      _
    // Predicated region
    $region18: #{tpu_custom_call.1} parent=1 // pred_check
      _
    $region19: #{tpu_custom_call.1} parent=1 // pred_check_branch
      %1058 = sbr.rel (0) target = $region21
    $region20: #{tpu_custom_call.1} parent=1 // pred_region
      %s1060 = ssub.s32 16, 16
      %1061 = vsyncadd [#allocation5], %s1060
      %s1063 = sshll.u32 [#allocation4], 4
      %s1064 = int_to_ptr.vmem [resolvable:$true] %s1063
      %1066 = dma.vmem_to_hbm [thread:$0]  %s1064, 16, %s4, [#allocation5]
    $region21: #{tpu_custom_call.1} parent=1 // pred_fallthru
      _
    // Predicated region
    $region22: #{tpu_custom_call.1} parent=1 // pred_check
      _
    $region23: #{tpu_custom_call.1} parent=1 // pred_check_branch
      %1068 = sbr.rel (0) target = $region25
    $region24: #{tpu_custom_call.1} parent=1 // pred_region
      %1069 = dma.done [#allocation3], 128
    $region25: #{tpu_custom_call.1} parent=1 // pred_fallthru
      _
    // Predicated region
    $region26: #{tpu_custom_call.1} parent=1 // pred_check
      _
    $region27: #{tpu_custom_call.1} parent=1 // pred_check_branch
      %1071 = sbr.rel (0) target = $region29
    $region28: #{tpu_custom_call.1} parent=1 // pred_region
      %1072 = dma.done [#allocation5], 16
    $region29: #{tpu_custom_call.1} parent=1 // pred_fallthru
      _
    %1073 = vsyncpa [#allocation3], 1
    %1074 = vsyncpa [#allocation5], 1

</llo_original>
